<compile_context>
chip_gen: v6e
topology: v6e:2x2x1
jax: 0.10.0
libtpu: 0.0.40
codegen_flags: <defaults>
</compile_context>

<pallas_src>
import math
import functools

import jax
import jax.numpy as jnp
from jax.experimental import pallas as pl
from jax.experimental.pallas import tpu as pltpu

OBS_DIM = 4        # CartPole-v1 observation space
ACTION_DIM = 1
HIDDEN = 256
IN_PAD = 8         # concat(obs, action) = 5, zero-padded to 8 (sublane multiple)
W3_PAD = 128       # lane-dense W3 for the MXU pass (output itself is NOT padded)
TB_DEFAULT = 1024  # batch tile: multiple of 256, ~4 MiB VMEM footprint


def _round_up(x, m):
    return (x + m - 1) // m * m


def _mlp_kernel(x_ref, w1_ref, b1_ref, w2_ref, b2_ref, w3_ref, b3_ref, o_ref):
    # Layer 1: single K=8 bf16 matmul (obs+action merged & zero-padded).
    h1 = jnp.dot(x_ref[...], w1_ref[...], preferred_element_type=jnp.float32)
    h1 = jnp.maximum(h1 + b1_ref[...], 0.0).astype(jnp.bfloat16)   # fused epilogue
    # Layer 2: (TB, 256) @ (256, 256)
    h2 = jnp.dot(h1, w2_ref[...], preferred_element_type=jnp.float32)
    h2 = jnp.maximum(h2 + b2_ref[...], 0.0).astype(jnp.bfloat16)
    # Layer 3: lane-dense padded W3 on the MXU, but store only the 4 real cols.
    y = jnp.dot(h2, w3_ref[...], preferred_element_type=jnp.float32)
    o_ref[...] = (y[:, :OBS_DIM] + b3_ref[...]).astype(o_ref.dtype)


def prepare_params(params):
    """One-time weight preprocessing (hoisted out of the forward path).

    params: (w1, b1, w2, b2, w3, b3) with weights stored [in, out] (transpose
    of PyTorch's [out, in]) and biases [1, out].
    Returns MXU-ready (bf16, padded) weights + f32 biases.
    """
    w1, b1, w2, b2, w3, b3 = params
    w1p = jnp.zeros((IN_PAD, HIDDEN), jnp.bfloat16).at[
        : OBS_DIM + ACTION_DIM, :].set(w1.astype(jnp.bfloat16))
    w2b = w2.astype(jnp.bfloat16)
    w3p = jnp.zeros((HIDDEN, W3_PAD), jnp.bfloat16).at[:, :OBS_DIM].set(
        w3.astype(jnp.bfloat16))
    return (w1p, b1.astype(jnp.float32), w2b, b2.astype(jnp.float32),
            w3p, b3.astype(jnp.float32))


def dynamics_model_forward(obs, action, prepared_params, *, block_b=TB_DEFAULT):
    """Pallas-fused forward of DynamicsModel.

    obs:    (B, OBS_DIM)    float32
    action: (B, ACTION_DIM) float32
    prepared_params: output of prepare_params()
    returns (B, OBS_DIM)    float32
    """
    w1p, b1, w2b, b2, w3p, b3 = prepared_params
    B = obs.shape[0]

    # Batch tile: multiple of 8 sublanes, capped at block_b; pad B to a multiple.
    tb = min(block_b, _round_up(B, 8))
    b_pad = _round_up(B, tb)
    num_blocks = b_pad // tb

    # Merge obs/action, cast to bf16, zero-pad feature dim to 8 and batch to b_pad.
    x = jnp.concatenate([obs, action], axis=-1).astype(jnp.bfloat16)
    x = jnp.pad(x, ((0, b_pad - B), (0, IN_PAD - x.shape[1])))

    def batch_spec(cols):
        return pl.BlockSpec((tb, cols), lambda i: (i, 0))

    def resident_spec(shape):
        # Constant block index -> fetched once, stays VMEM-resident across steps.
        return pl.BlockSpec(shape, lambda i: (0, 0))

    flops = 2 * b_pad * (IN_PAD * HIDDEN + HIDDEN * HIDDEN + HIDDEN * W3_PAD)
    weight_bytes = (w1p.size * 2 + w2b.size * 2 + w3p.size * 2
                    + (b1.size + b2.size + b3.size) * 4)
    bytes_accessed = x.size * 2 + b_pad * OBS_DIM * 4 + weight_bytes
    cost = pl.CostEstimate(flops=flops, transcendentals=0,
                           bytes_accessed=bytes_accessed)

    out = pl.pallas_call(
        _mlp_kernel,
        out_shape=jax.ShapeDtypeStruct((b_pad, OBS_DIM), jnp.float32),
        grid=(num_blocks,),
        in_specs=[
            batch_spec(IN_PAD),          # merged obs/action (bf16)
            resident_spec(w1p.shape),
            resident_spec(b1.shape),
            resident_spec(w2b.shape),
            resident_spec(b2.shape),
            resident_spec(w3p.shape),
            resident_spec(b3.shape),
        ],
        out_specs=batch_spec(OBS_DIM),   # unpadded (tb, 4) output -> 16 B/row HBM
        compiler_params=pltpu.CompilerParams(
            dimension_semantics=("parallel",),
            vmem_limit_bytes=32 << 20),
        cost_estimate=cost,
    )(x, w1p, b1, w2b, b2, w3p, b3)

    return out[:B]


def init_params(key):
    """nn.Linear default init: U(-1/sqrt(fan_in), 1/sqrt(fan_in)).

    Weights stored as [in, out] (transpose of PyTorch's [out, in]).
    Biases stored as [1, out] so they are 2-D inside the kernel.
    """
    dims = [(OBS_DIM + ACTION_DIM, HIDDEN), (HIDDEN, HIDDEN), (HIDDEN, OBS_DIM)]
    params = []
    for fan_in, fan_out in dims:
        key, kw, kb = jax.random.split(key, 3)
        bound = 1.0 / math.sqrt(fan_in)
        w = jax.random.uniform(kw, (fan_in, fan_out), jnp.float32, -bound, bound)
        b = jax.random.uniform(kb, (1, fan_out), jnp.float32, -bound, bound)
        params += [w, b]
    return tuple(params)


def _reference_forward(obs, action, params):
    w1, b1, w2, b2, w3, b3 = params
    x = jnp.concatenate([obs, action], axis=-1)
    h1 = jax.nn.relu(x @ w1 + b1)
    h2 = jax.nn.relu(h1 @ w2 + b2)
    return h2 @ w3 + b3


if __name__ == "__main__":
    key = jax.random.PRNGKey(0)
    kp, ko, ka = jax.random.split(key, 3)

    batch = 8
    params = init_params(kp)
    prepared = prepare_params(params)   # one-time weight prep (bf16 cast + pad)
    obs = jax.random.normal(ko, (batch, OBS_DIM), jnp.float32)
    action = jax.random.normal(ka, (batch, ACTION_DIM), jnp.float32)

    fwd = jax.jit(functools.partial(dynamics_model_forward, block_b=TB_DEFAULT))
    out = jax.block_until_ready(fwd(obs, action, prepared))

    ref = _reference_forward(obs, action, params)
    assert out.shape == (batch, OBS_DIM)
    # bf16 matmul operands -> loosen tolerance vs the f32 reference.
    assert jnp.allclose(out, ref, atol=5e-2, rtol=5e-2), "mismatch vs reference"

    print("KERNEL_OK")
</pallas_src>

<mosaic_0001>
module attributes {stable_mosaic.version = 11 : i64} {
  func.func @_mlp_kernel(%arg0: i32, %arg1: memref<8x8xbf16, #tpu.memory_space<vmem>>, %arg2: memref<8x256xbf16, #tpu.memory_space<vmem>>, %arg3: memref<1x256xf32, #tpu.memory_space<vmem>>, %arg4: memref<256x256xbf16, #tpu.memory_space<vmem>>, %arg5: memref<1x256xf32, #tpu.memory_space<vmem>>, %arg6: memref<256x128xbf16, #tpu.memory_space<vmem>>, %arg7: memref<1x4xf32, #tpu.memory_space<vmem>>, %arg8: memref<8x4xf32, #tpu.memory_space<vmem>>) attributes {dimension_semantics = [#tpu.dimension_semantics<parallel>], iteration_bounds = array<i64: 1>, scalar_prefetch = 0 : i64, scratch_operands = 0 : i64, tpu.core_type = #tpu.core_type<tc>, window_params = [{transform_indices = @transform_0, window_bounds = array<i64: 8, 8>}, {pipeline_mode = #tpu.pipeline_mode<synchronous>, transform_indices = @transform_1, window_bounds = array<i64: 8, 256>}, {pipeline_mode = #tpu.pipeline_mode<synchronous>, transform_indices = @transform_2, window_bounds = array<i64: 1, 256>}, {pipeline_mode = #tpu.pipeline_mode<synchronous>, transform_indices = @transform_3, window_bounds = array<i64: 256, 256>}, {pipeline_mode = #tpu.pipeline_mode<synchronous>, transform_indices = @transform_4, window_bounds = array<i64: 1, 256>}, {pipeline_mode = #tpu.pipeline_mode<synchronous>, transform_indices = @transform_5, window_bounds = array<i64: 256, 128>}, {pipeline_mode = #tpu.pipeline_mode<synchronous>, transform_indices = @transform_6, window_bounds = array<i64: 1, 4>}, {transform_indices = @transform_7, window_bounds = array<i64: 8, 4>}]} {
    %c0 = arith.constant 0 : index
    %c0_0 = arith.constant 0 : index
    %0 = vector.load %arg1[%c0, %c0_0] : memref<8x8xbf16, #tpu.memory_space<vmem>>, vector<8x8xbf16>
    %c0_1 = arith.constant 0 : index
    %c0_2 = arith.constant 0 : index
    %1 = vector.load %arg2[%c0_1, %c0_2] : memref<8x256xbf16, #tpu.memory_space<vmem>>, vector<8x256xbf16>
    %cst = arith.constant dense<0.000000e+00> : vector<8x256xf32>
    %2 = tpu.matmul %0, %1, %cst {dimension_numbers = #tpu.dot_dimension_numbers<[1], [0], [0], [1], [0, 0, 1, 1], [], []>} : vector<8x8xbf16>, vector<8x256xbf16>, vector<8x256xf32> -> vector<8x256xf32>
    %c0_3 = arith.constant 0 : index
    %c0_4 = arith.constant 0 : index
    %3 = vector.load %arg3[%c0_3, %c0_4] : memref<1x256xf32, #tpu.memory_space<vmem>>, vector<1x256xf32>
    %4 = vector.broadcast %3 : vector<1x256xf32> to vector<8x256xf32>
    %5 = arith.addf %2, %4 : vector<8x256xf32>
    %cst_5 = arith.constant 0.000000e+00 : f32
    %6 = vector.broadcast %cst_5 : f32 to vector<8x256xf32>
    %7 = arith.maximumf %5, %6 : vector<8x256xf32>
    %8 = arith.truncf %7 : vector<8x256xf32> to vector<8x256xbf16>
    %c0_6 = arith.constant 0 : index
    %c0_7 = arith.constant 0 : index
    %9 = vector.load %arg4[%c0_6, %c0_7] : memref<256x256xbf16, #tpu.memory_space<vmem>>, vector<256x256xbf16>
    %cst_8 = arith.constant dense<0.000000e+00> : vector<8x256xf32>
    %10 = tpu.matmul %8, %9, %cst_8 {dimension_numbers = #tpu.dot_dimension_numbers<[1], [0], [0], [1], [0, 0, 1, 1], [], []>} : vector<8x256xbf16>, vector<256x256xbf16>, vector<8x256xf32> -> vector<8x256xf32>
    %c0_9 = arith.constant 0 : index
    %c0_10 = arith.constant 0 : index
    %11 = vector.load %arg5[%c0_9, %c0_10] : memref<1x256xf32, #tpu.memory_space<vmem>>, vector<1x256xf32>
    %12 = vector.broadcast %11 : vector<1x256xf32> to vector<8x256xf32>
    %13 = arith.addf %10, %12 : vector<8x256xf32>
    %cst_11 = arith.constant 0.000000e+00 : f32
    %14 = vector.broadcast %cst_11 : f32 to vector<8x256xf32>
    %15 = arith.maximumf %13, %14 : vector<8x256xf32>
    %16 = arith.truncf %15 : vector<8x256xf32> to vector<8x256xbf16>
    %c0_12 = arith.constant 0 : index
    %c0_13 = arith.constant 0 : index
    %17 = vector.load %arg6[%c0_12, %c0_13] : memref<256x128xbf16, #tpu.memory_space<vmem>>, vector<256x128xbf16>
    %cst_14 = arith.constant dense<0.000000e+00> : vector<8x128xf32>
    %18 = tpu.matmul %16, %17, %cst_14 {dimension_numbers = #tpu.dot_dimension_numbers<[1], [0], [0], [1], [0, 0, 1, 1], [], []>} : vector<8x256xbf16>, vector<256x128xbf16>, vector<8x128xf32> -> vector<8x128xf32>
    %19 = vector.extract_strided_slice %18 {offsets = [0, 0], sizes = [8, 4], strides = [1, 1]} : vector<8x128xf32> to vector<8x4xf32>
    %c0_15 = arith.constant 0 : index
    %c0_16 = arith.constant 0 : index
    %20 = vector.load %arg7[%c0_15, %c0_16] : memref<1x4xf32, #tpu.memory_space<vmem>>, vector<1x4xf32>
    %21 = vector.broadcast %20 : vector<1x4xf32> to vector<8x4xf32>
    %22 = arith.addf %19, %21 : vector<8x4xf32>
    %c0_17 = arith.constant 0 : index
    %c0_18 = arith.constant 0 : index
    %23 = vector.load %arg8[%c0_17, %c0_18] : memref<8x4xf32, #tpu.memory_space<vmem>>, vector<8x4xf32>
    tpu.vector_store %arg8[%c0_17, %c0_18], %22 {strides = array<i32>} : memref<8x4xf32, #tpu.memory_space<vmem>>, vector<8x4xf32>,
    return
  }
  func.func @transform_0(%arg0: i32) -> (i32, i32) {
    %c0_i32 = arith.constant 0 : i32
    %c0_i32_0 = arith.constant 0 : i32
    return %arg0, %c0_i32 : i32, i32
  }
  func.func @transform_1(%arg0: i32) -> (i32, i32) {
    %c0_i32 = arith.constant 0 : i32
    %c0_i32_0 = arith.constant 0 : i32
    %c0_i32_1 = arith.constant 0 : i32
    return %c0_i32, %c0_i32_0 : i32, i32
  }
  func.func @transform_2(%arg0: i32) -> (i32, i32) {
    %c0_i32 = arith.constant 0 : i32
    %c0_i32_0 = arith.constant 0 : i32
    %c0_i32_1 = arith.constant 0 : i32
    return %c0_i32, %c0_i32_0 : i32, i32
  }
  func.func @transform_3(%arg0: i32) -> (i32, i32) {
    %c0_i32 = arith.constant 0 : i32
    %c0_i32_0 = arith.constant 0 : i32
    %c0_i32_1 = arith.constant 0 : i32
    return %c0_i32, %c0_i32_0 : i32, i32
  }
  func.func @transform_4(%arg0: i32) -> (i32, i32) {
    %c0_i32 = arith.constant 0 : i32
    %c0_i32_0 = arith.constant 0 : i32
    %c0_i32_1 = arith.constant 0 : i32
    return %c0_i32, %c0_i32_0 : i32, i32
  }
  func.func @transform_5(%arg0: i32) -> (i32, i32) {
    %c0_i32 = arith.constant 0 : i32
    %c0_i32_0 = arith.constant 0 : i32
    %c0_i32_1 = arith.constant 0 : i32
    return %c0_i32, %c0_i32_0 : i32, i32
  }
  func.func @transform_6(%arg0: i32) -> (i32, i32) {
    %c0_i32 = arith.constant 0 : i32
    %c0_i32_0 = arith.constant 0 : i32
    %c0_i32_1 = arith.constant 0 : i32
    return %c0_i32, %c0_i32_0 : i32, i32
  }
  func.func @transform_7(%arg0: i32) -> (i32, i32) {
    %c0_i32 = arith.constant 0 : i32
    %c0_i32_0 = arith.constant 0 : i32
    return %arg0, %c0_i32 : i32, i32
  }
}

</mosaic_0001>

<llo_original>
// kernel: dynamics_model_forward.1
$region0: #{dynamics_model_forward.1}
  #allocation0 [shape = 'u32[]', space=smem, size = 0x4, offset = 0x4, fixed_abs, tag = 'smem constant byte address 0x4 - core index']
  #allocation1 [shape = 'u32[144,128]{1,0:T(1,128)}', space=vmem, size = 0x12000, scoped, tag = 'internal scratch']
  %s0 = inlined_call_operand.vmem [shape: bf16[8,8], index: 0, kind: input, shape index: {}]
  %s1 = inlined_call_operand.vmem [shape: bf16[8,256], index: 1, kind: input, shape index: {}]
  %s2 = inlined_call_operand.vmem [shape: f32[1,256], index: 2, kind: input, shape index: {}]
  %s3 = inlined_call_operand.hbm [shape: bf16[256,256], index: 3, kind: input, shape index: {}]
  %s4 = inlined_call_operand.vmem [shape: f32[1,256], index: 4, kind: input, shape index: {}]
  %s5 = inlined_call_operand.hbm [shape: bf16[256,128], index: 5, kind: input, shape index: {}]
  %s6 = inlined_call_operand.vmem [shape: f32[1,4], index: 6, kind: input, shape index: {}]
  %s7 = inlined_call_operand.vmem [shape: f32[8,4], index: 7, kind: output, shape index: {}]
  %s8 = sld [smem:[#allocation0]]
  $region46: #{dynamics_model_forward.1} parent=0
    _
  %s10 = ssub.s32 1, %s8
  %s11 = scalar_select 0, %s10, %s8
  $region1: #{dynamics_model_forward.1} parent=0
    #allocation2 [shape = 'u8[131072]{0}', space=vmem, size = 0x20000, scoped, tag = 'input window, operand 3, single buffered']
    #allocation3 [shape = 's32[1]{0}', space=sflag, size = 0x4, scoped, tag = 'scoped memory for dynamics_model_forward.1']
    #allocation4 [shape = 'u8[65536]{0}', space=vmem, size = 0x10000, scoped, tag = 'input window, operand 5, single buffered']
    #allocation5 [shape = 's32[1]{0}', space=sflag, size = 0x4, scoped, tag = 'scoped memory for dynamics_model_forward.1']
    %12 = vsyncpa [#allocation3], 0
    %13 = vsyncpa [#allocation5], 0
    // Predicated region
    $region2: #{dynamics_model_forward.1} parent=1 // pred_check
      _
    $region3: #{dynamics_model_forward.1} parent=1 // pred_check_branch
      %15 = sbr.rel (0) target = $region5
    $region4: #{dynamics_model_forward.1} parent=1 // pred_region
      _
    $region5: #{dynamics_model_forward.1} parent=1 // pred_fallthru
      _
    // Predicated region
    $region6: #{dynamics_model_forward.1} parent=1 // pred_check
      _
    $region7: #{dynamics_model_forward.1} parent=1 // pred_check_branch
      %17 = sbr.rel (0) target = $region9
    $region8: #{dynamics_model_forward.1} parent=1 // pred_region
      _
    $region9: #{dynamics_model_forward.1} parent=1 // pred_fallthru
      _
    // Predicated region
    $region10: #{dynamics_model_forward.1} parent=1 // pred_check
      _
    $region11: #{dynamics_model_forward.1} parent=1 // pred_check_branch
      %19 = sbr.rel (0) target = $region13
    $region12: #{dynamics_model_forward.1} parent=1 // pred_region
      _
    $region13: #{dynamics_model_forward.1} parent=1 // pred_fallthru
      _
    // Predicated region
    $region14: #{dynamics_model_forward.1} parent=1 // pred_check
      _
    $region15: #{dynamics_model_forward.1} parent=1 // pred_check_branch
      %21 = sbr.rel (0) target = $region17
    $region16: #{dynamics_model_forward.1} parent=1 // pred_region
      %s23 = ssub.s32 4096, 4096
      %24 = vsyncadd [#allocation3], %s23
      %s25 = sshll.u32 [#allocation2], 4
      %s26 = int_to_ptr.vmem [resolvable:$true] %s25
      %31 = dma.hbm_to_vmem [thread:$0]  %s3, 4096, %s26, [#allocation3], 128, 128, 8
    $region17: #{dynamics_model_forward.1} parent=1 // pred_fallthru
      _
    // Predicated region
    $region18: #{dynamics_model_forward.1} parent=1 // pred_check
      _
    $region19: #{dynamics_model_forward.1} parent=1 // pred_check_branch
      %33 = sbr.rel (0) target = $region21
    $region20: #{dynamics_model_forward.1} parent=1 // pred_region
      _
    $region21: #{dynamics_model_forward.1} parent=1 // pred_fallthru
      _
    // Predicated region
    $region22: #{dynamics_model_forward.1} parent=1 // pred_check
      _
    $region23: #{dynamics_model_forward.1} parent=1 // pred_check_branch
      %35 = sbr.rel (0) target = $region25
    $region24: #{dynamics_model_forward.1} parent=1 // pred_region
      %s37 = ssub.s32 2048, 2048
      %38 = vsyncadd [#allocation5], %s37
      %s39 = sshll.u32 [#allocation4], 4
      %s40 = int_to_ptr.vmem [resolvable:$true] %s39
      %45 = dma.hbm_to_vmem [thread:$0]  %s5, 2048, %s40, [#allocation5], 64, 64, 4
    $region25: #{dynamics_model_forward.1} parent=1 // pred_fallthru
      _
    // Predicated region
    $region26: #{dynamics_model_forward.1} parent=1 // pred_check
      _
    $region27: #{dynamics_model_forward.1} parent=1 // pred_check_branch
      %47 = sbr.rel (0) target = $region29
    $region28: #{dynamics_model_forward.1} parent=1 // pred_region
      _
    $region29: #{dynamics_model_forward.1} parent=1 // pred_fallthru
      _
    // Predicated region
    $region30: #{dynamics_model_forward.1} parent=1 // pred_check
      _
    $region31: #{dynamics_model_forward.1} parent=1 // pred_check_branch
      %49 = sbr.rel (0) target = $region33
    $region32: #{dynamics_model_forward.1} parent=1 // pred_region
      %50 = dma.done [#allocation3], 4096
    $region33: #{dynamics_model_forward.1} parent=1 // pred_fallthru
      _
    // Predicated region
    $region34: #{dynamics_model_forward.1} parent=1 // pred_check
      _
    $region35: #{dynamics_model_forward.1} parent=1 // pred_check_branch
      %52 = sbr.rel (0) target = $region37
    $region36: #{dynamics_model_forward.1} parent=1 // pred_region
      %53 = dma.done [#allocation5], 2048
    $region37: #{dynamics_model_forward.1} parent=1 // pred_fallthru
      _
    %v55 = vld [vmem:[%s0] sm:$0xf]
    %v56 = vld [vmem:[%s1] sm:$0xff]
    %v57 = vld [vmem:[%s2] sm:$0x3]
    %v59 = vlaneseq
    %v60 = vshrl.u32 %v59, 7
    %v61 = vsub.s32 0, %v60
    %v62 = vrot.slane %v57, %v61
    %v63 = vlaneseq
    %v64 = vshrl.u32 %v63, 7
    %v65 = vsub.s32 1, %v64
    %v66 = vrot.slane %v57, %v65
    %v70 = vunpack.c.l.b16 %v56
    %v71 = vunpack.c.h.b16 %v56
    %v72 = vpack.c.b16 %v70, %v70
    %v73 = vpack.c.b16 %v71, %v71
    %vm74 = vcmask 64512
    %v76 = vsel %vm74, %v55, 0
    %vm78 = vcmask 1043456
    %v80 = vsel %vm78, %v72, 0
    %v83 = vsel %vm78, %v73, 0
    %85 = vmatprep.subr.bf16.mxu0 0
    %86 = vmatpush1.bf16.msra.mxu0 0
    %87 = vmatprep.subr.bf16.mxu0 0
    %88 = vmatpush1.bf16.msra.mxu0 0
    %89 = vmatprep.subr.bf16.mxu0 0
    %90 = vmatpush1.bf16.msra.mxu0 0
    %91 = vmatprep.subr.bf16.mxu0 0
    %92 = vmatpush1.bf16.msra.mxu0 0
    %93 = vmatprep.subr.bf16.mxu0 0
    %94 = vmatpush1.bf16.msra.mxu0 0
    %95 = vmatprep.subr.bf16.mxu0 0
    %96 = vmatpush1.bf16.msra.mxu0 0
    %97 = vmatprep.subr.bf16.mxu0 0
    %98 = vmatpush1.bf16.msra.mxu0 0
    %99 = vmatprep.subr.bf16.mxu0 %v83
    %100 = vmatpush1.bf16.msra.mxu0 %v80
    %101 = vmatprep.subr.bf16.mxu0 0
    %102 = vmatpush2.bf16.msra.mxu0 0
    %103 = vmatprep.subr.bf16.mxu0 0
    %104 = vmatpush2.bf16.msra.mxu0 0
    %105 = vmatprep.subr.bf16.mxu0 0
    %106 = vmatpush2.bf16.msra.mxu0 0
    %107 = vmatprep.subr.bf16.mxu0 0
    %108 = vmatpush2.bf16.msra.mxu0 0
    %109 = vmatprep.subr.bf16.mxu0 0
    %110 = vmatpush2.bf16.msra.mxu0 0
    %111 = vmatprep.subr.bf16.mxu0 0
    %112 = vmatpush2.bf16.msra.mxu0 0
    %113 = vmatprep.subr.bf16.mxu0 0
    %114 = vmatpush2.bf16.msra.mxu0 0
    %115 = vmatprep.subr.bf16.mxu0 0
    %116 = vmatpush2.bf16.msra.mxu0 0
    %117 = vmatprep.mubr.bf16.mxu0 0
    %118 = vmatmul.mubr.bf16.gmra.mxu0 %v76
    %v119 = vpop.f32.mrf.mxu0
    %v120 = vadd.f32 %v62, %v119
    %v121 = vpop.f32.mrf.mxu0
    %v122 = vadd.f32 %v66, %v121
    %v123 = vpop.f32.mrf.mxu0
    %v124 = vpop.f32.mrf.mxu0
    %125 = vdwg.mxu0
    %v126 = vmax.f32 %v120, 0.0
    %v127 = vmax.f32 %v122, 0.0
    %v128 = vpack.c.bf16 %v126, %v126
    %v129 = vpack.c.bf16 %v127, %v127
    %v130 = vld [vmem:[#allocation2] sm:$0xff]
    %v131 = vld [vmem:[#allocation2 + $0x8] sm:$0xff]
    %v132 = vld [vmem:[#allocation2 + $0x10] sm:$0xff]
    %v133 = vld [vmem:[#allocation2 + $0x18] sm:$0xff]
    %v134 = vld [vmem:[#allocation2 + $0x20] sm:$0xff]
    %v135 = vld [vmem:[#allocation2 + $0x28] sm:$0xff]
    %v136 = vld [vmem:[#allocation2 + $0x30] sm:$0xff]
    %v137 = vld [vmem:[#allocation2 + $0x38] sm:$0xff]
    %v138 = vld [vmem:[#allocation2 + $0x40] sm:$0xff]
    %v139 = vld [vmem:[#allocation2 + $0x48] sm:$0xff]
    %v140 = vld [vmem:[#allocation2 + $0x50] sm:$0xff]
    %v141 = vld [vmem:[#allocation2 + $0x58] sm:$0xff]
    %v142 = vld [vmem:[#allocation2 + $0x60] sm:$0xff]
    %v143 = vld [vmem:[#allocation2 + $0x68] sm:$0xff]
    %v144 = vld [vmem:[#allocation2 + $0x70] sm:$0xff]
    %v145 = vld [vmem:[#allocation2 + $0x78] sm:$0xff]
    %v146 = vld [vmem:[#allocation2 + $0x80] sm:$0xff]
    %v147 = vld [vmem:[#allocation2 + $0x88] sm:$0xff]
    %v148 = vld [vmem:[#allocation2 + $0x90] sm:$0xff]
    %v149 = vld [vmem:[#allocation2 + $0x98] sm:$0xff]
    %v150 = vld [vmem:[#allocation2 + $0xa0] sm:$0xff]
    %v151 = vld [vmem:[#allocation2 + $0xa8] sm:$0xff]
    %v152 = vld [vmem:[#allocation2 + $0xb0] sm:$0xff]
    %v153 = vld [vmem:[#allocation2 + $0xb8] sm:$0xff]
    %v154 = vld [vmem:[#allocation2 + $0xc0] sm:$0xff]
    %v155 = vld [vmem:[#allocation2 + $0xc8] sm:$0xff]
    %v156 = vld [vmem:[#allocation2 + $0xd0] sm:$0xff]
    %v157 = vld [vmem:[#allocation2 + $0xd8] sm:$0xff]
    %v158 = vld [vmem:[#allocation2 + $0xe0] sm:$0xff]
    %v159 = vld [vmem:[#allocation2 + $0xe8] sm:$0xff]
    %v160 = vld [vmem:[#allocation2 + $0xf0] sm:$0xff]
    %v161 = vld [vmem:[#allocation2 + $0xf8] sm:$0xff]
    %v162 = vld [vmem:[%s4] sm:$0x3]
    %v164 = vlaneseq
    %v165 = vshrl.u32 %v164, 7
    %v166 = vsub.s32 0, %v165
    %v167 = vrot.slane %v162, %v166
    %v168 = vlaneseq
    %v169 = vshrl.u32 %v168, 7
    %v170 = vsub.s32 1, %v169
    %v171 = vrot.slane %v162, %v170
    %v206 = vunpack.c.l.b16 %v130
    %v207 = vunpack.c.h.b16 %v130
    %v208 = vunpack.c.l.b16 %v131
    %v209 = vunpack.c.h.b16 %v131
    %v210 = vunpack.c.l.b16 %v132
    %v211 = vunpack.c.h.b16 %v132
    %v212 = vunpack.c.l.b16 %v133
    %v213 = vunpack.c.h.b16 %v133
    %v214 = vunpack.c.l.b16 %v134
    %v215 = vunpack.c.h.b16 %v134
    %v216 = vunpack.c.l.b16 %v135
    %v217 = vunpack.c.h.b16 %v135
    %v218 = vunpack.c.l.b16 %v136
    %v219 = vunpack.c.h.b16 %v136
    %v220 = vunpack.c.l.b16 %v137
    %v221 = vunpack.c.h.b16 %v137
    %v222 = vunpack.c.l.b16 %v138
    %v223 = vunpack.c.h.b16 %v138
    %v224 = vunpack.c.l.b16 %v139
    %v225 = vunpack.c.h.b16 %v139
    %v226 = vunpack.c.l.b16 %v140
    %v227 = vunpack.c.h.b16 %v140
    %v228 = vunpack.c.l.b16 %v141
    %v229 = vunpack.c.h.b16 %v141
    %v230 = vunpack.c.l.b16 %v142
    %v231 = vunpack.c.h.b16 %v142
    %v232 = vunpack.c.l.b16 %v143
    %v233 = vunpack.c.h.b16 %v143
    %v234 = vunpack.c.l.b16 %v144
    %v235 = vunpack.c.h.b16 %v144
    %v236 = vunpack.c.l.b16 %v145
    %v237 = vunpack.c.h.b16 %v145
    %v238 = vunpack.c.l.b16 %v146
    %v239 = vunpack.c.h.b16 %v146
    %v240 = vunpack.c.l.b16 %v147
    %v241 = vunpack.c.h.b16 %v147
    %v242 = vunpack.c.l.b16 %v148
    %v243 = vunpack.c.h.b16 %v148
    %v244 = vunpack.c.l.b16 %v149
    %v245 = vunpack.c.h.b16 %v149
    %v246 = vunpack.c.l.b16 %v150
    %v247 = vunpack.c.h.b16 %v150
    %v248 = vunpack.c.l.b16 %v151
    %v249 = vunpack.c.h.b16 %v151
    %v250 = vunpack.c.l.b16 %v152
    %v251 = vunpack.c.h.b16 %v152
    %v252 = vunpack.c.l.b16 %v153
    %v253 = vunpack.c.h.b16 %v153
    %v254 = vunpack.c.l.b16 %v154
    %v255 = vunpack.c.h.b16 %v154
    %v256 = vunpack.c.l.b16 %v155
    %v257 = vunpack.c.h.b16 %v155
    %v258 = vunpack.c.l.b16 %v156
    %v259 = vunpack.c.h.b16 %v156
    %v260 = vunpack.c.l.b16 %v157
    %v261 = vunpack.c.h.b16 %v157
    %v262 = vunpack.c.l.b16 %v158
    %v263 = vunpack.c.h.b16 %v158
    %v264 = vunpack.c.l.b16 %v159
    %v265 = vunpack.c.h.b16 %v159
    %v266 = vunpack.c.l.b16 %v160
    %v267 = vunpack.c.h.b16 %v160
    %v268 = vunpack.c.l.b16 %v161
    %v269 = vunpack.c.h.b16 %v161
    %v270 = vpack.c.b16 %v208, %v206
    %v271 = vpack.c.b16 %v209, %v207
    %v272 = vpack.c.b16 %v212, %v210
    %v273 = vpack.c.b16 %v213, %v211
    %v274 = vpack.c.b16 %v216, %v214
    %v275 = vpack.c.b16 %v217, %v215
    %v276 = vpack.c.b16 %v220, %v218
    %v277 = vpack.c.b16 %v221, %v219
    %v278 = vpack.c.b16 %v224, %v222
    %v279 = vpack.c.b16 %v225, %v223
    %v280 = vpack.c.b16 %v228, %v226
    %v281 = vpack.c.b16 %v229, %v227
    %v282 = vpack.c.b16 %v232, %v230
    %v283 = vpack.c.b16 %v233, %v231
    %v284 = vpack.c.b16 %v236, %v234
    %v285 = vpack.c.b16 %v237, %v235
    %v286 = vpack.c.b16 %v240, %v238
    %v287 = vpack.c.b16 %v241, %v239
    %v288 = vpack.c.b16 %v244, %v242
    %v289 = vpack.c.b16 %v245, %v243
    %v290 = vpack.c.b16 %v248, %v246
    %v291 = vpack.c.b16 %v249, %v247
    %v292 = vpack.c.b16 %v252, %v250
    %v293 = vpack.c.b16 %v253, %v251
    %v294 = vpack.c.b16 %v256, %v254
    %v295 = vpack.c.b16 %v257, %v255
    %v296 = vpack.c.b16 %v260, %v258
    %v297 = vpack.c.b16 %v261, %v259
    %v298 = vpack.c.b16 %v264, %v262
    %v299 = vpack.c.b16 %v265, %v263
    %v300 = vpack.c.b16 %v268, %v266
    %v301 = vpack.c.b16 %v269, %v267
    %334 = vmatprep.subr.bf16.mxu0 %v285
    %335 = vmatpush1.bf16.msra.mxu0 %v284
    %336 = vmatprep.subr.bf16.mxu0 %v283
    %337 = vmatpush1.bf16.msra.mxu0 %v282
    %338 = vmatprep.subr.bf16.mxu0 %v281
    %339 = vmatpush1.bf16.msra.mxu0 %v280
    %340 = vmatprep.subr.bf16.mxu0 %v279
    %341 = vmatpush1.bf16.msra.mxu0 %v278
    %342 = vmatprep.subr.bf16.mxu0 %v277
    %343 = vmatpush1.bf16.msra.mxu0 %v276
    %344 = vmatprep.subr.bf16.mxu0 %v275
    %345 = vmatpush1.bf16.msra.mxu0 %v274
    %346 = vmatprep.subr.bf16.mxu0 %v273
    %347 = vmatpush1.bf16.msra.mxu0 %v272
    %348 = vmatprep.subr.bf16.mxu0 %v271
    %349 = vmatpush1.bf16.msra.mxu0 %v270
    %350 = vmatprep.subr.bf16.mxu0 %v301
    %351 = vmatpush2.bf16.msra.mxu0 %v300
    %352 = vmatprep.subr.bf16.mxu0 %v299
    %353 = vmatpush2.bf16.msra.mxu0 %v298
    %354 = vmatprep.subr.bf16.mxu0 %v297
    %355 = vmatpush2.bf16.msra.mxu0 %v296
    %356 = vmatprep.subr.bf16.mxu0 %v295
    %357 = vmatpush2.bf16.msra.mxu0 %v294
    %358 = vmatprep.subr.bf16.mxu0 %v293
    %359 = vmatpush2.bf16.msra.mxu0 %v292
    %360 = vmatprep.subr.bf16.mxu0 %v291
    %361 = vmatpush2.bf16.msra.mxu0 %v290
    %362 = vmatprep.subr.bf16.mxu0 %v289
    %363 = vmatpush2.bf16.msra.mxu0 %v288
    %364 = vmatprep.subr.bf16.mxu0 %v287
    %365 = vmatpush2.bf16.msra.mxu0 %v286
    %366 = vmatprep.mubr.bf16.mxu0 %v129
    %367 = vmatmul.mubr.bf16.gmra.mxu0 %v128
    %v368 = vpop.f32.mrf.mxu0
    %v369 = vadd.f32 %v167, %v368
    %v370 = vpop.f32.mrf.mxu0
    %v371 = vadd.f32 %v171, %v370
    %v372 = vpop.f32.mrf.mxu0
    %v373 = vpop.f32.mrf.mxu0
    %374 = vdwg.mxu0
    %v375 = vmax.f32 %v369, 0.0
    %v376 = vmax.f32 %v371, 0.0
    %v377 = vpack.c.bf16 %v375, %v375
    %v378 = vpack.c.bf16 %v376, %v376
    %v379 = vld [vmem:[#allocation4] sm:$0xf]
    %v380 = vld [vmem:[#allocation4 + $0x4] sm:$0xf]
    %v381 = vld [vmem:[#allocation4 + $0x8] sm:$0xf]
    %v382 = vld [vmem:[#allocation4 + $0xc] sm:$0xf]
    %v383 = vld [vmem:[#allocation4 + $0x10] sm:$0xf]
    %v384 = vld [vmem:[#allocation4 + $0x14] sm:$0xf]
    %v385 = vld [vmem:[#allocation4 + $0x18] sm:$0xf]
    %v386 = vld [vmem:[#allocation4 + $0x1c] sm:$0xf]
    %v387 = vld [vmem:[#allocation4 + $0x20] sm:$0xf]
    %v388 = vld [vmem:[#allocation4 + $0x24] sm:$0xf]
    %v389 = vld [vmem:[#allocation4 + $0x28] sm:$0xf]
    %v390 = vld [vmem:[#allocation4 + $0x2c] sm:$0xf]
    %v391 = vld [vmem:[#allocation4 + $0x30] sm:$0xf]
    %v392 = vld [vmem:[#allocation4 + $0x34] sm:$0xf]
    %v393 = vld [vmem:[#allocation4 + $0x38] sm:$0xf]
    %v394 = vld [vmem:[#allocation4 + $0x3c] sm:$0xf]
    %v395 = vld [vmem:[#allocation4 + $0x40] sm:$0xf]
    %v396 = vld [vmem:[#allocation4 + $0x44] sm:$0xf]
    %v397 = vld [vmem:[#allocation4 + $0x48] sm:$0xf]
    %v398 = vld [vmem:[#allocation4 + $0x4c] sm:$0xf]
    %v399 = vld [vmem:[#allocation4 + $0x50] sm:$0xf]
    %v400 = vld [vmem:[#allocation4 + $0x54] sm:$0xf]
    %v401 = vld [vmem:[#allocation4 + $0x58] sm:$0xf]
    %v402 = vld [vmem:[#allocation4 + $0x5c] sm:$0xf]
    %v403 = vld [vmem:[#allocation4 + $0x60] sm:$0xf]
    %v404 = vld [vmem:[#allocation4 + $0x64] sm:$0xf]
    %v405 = vld [vmem:[#allocation4 + $0x68] sm:$0xf]
    %v406 = vld [vmem:[#allocation4 + $0x6c] sm:$0xf]
    %v407 = vld [vmem:[#allocation4 + $0x70] sm:$0xf]
    %v408 = vld [vmem:[#allocation4 + $0x74] sm:$0xf]
    %v409 = vld [vmem:[#allocation4 + $0x78] sm:$0xf]
    %v410 = vld [vmem:[#allocation4 + $0x7c] sm:$0xf]
    %v443 = vunpack.c.l.b16 %v379
    %v444 = vunpack.c.l.b16 %v380
    %v445 = vunpack.c.l.b16 %v381
    %v446 = vunpack.c.l.b16 %v382
    %v447 = vunpack.c.l.b16 %v383
    %v448 = vunpack.c.l.b16 %v384
    %v449 = vunpack.c.l.b16 %v385
    %v450 = vunpack.c.l.b16 %v386
    %v451 = vunpack.c.l.b16 %v387
    %v452 = vunpack.c.l.b16 %v388
    %v453 = vunpack.c.l.b16 %v389
    %v454 = vunpack.c.l.b16 %v390
    %v455 = vunpack.c.l.b16 %v391
    %v456 = vunpack.c.l.b16 %v392
    %v457 = vunpack.c.l.b16 %v393
    %v458 = vunpack.c.l.b16 %v394
    %v459 = vunpack.c.l.b16 %v395
    %v460 = vunpack.c.l.b16 %v396
    %v461 = vunpack.c.l.b16 %v397
    %v462 = vunpack.c.l.b16 %v398
    %v463 = vunpack.c.l.b16 %v399
    %v464 = vunpack.c.l.b16 %v400
    %v465 = vunpack.c.l.b16 %v401
    %v466 = vunpack.c.l.b16 %v402
    %v467 = vunpack.c.l.b16 %v403
    %v468 = vunpack.c.l.b16 %v404
    %v469 = vunpack.c.l.b16 %v405
    %v470 = vunpack.c.l.b16 %v406
    %v471 = vunpack.c.l.b16 %v407
    %v472 = vunpack.c.l.b16 %v408
    %v473 = vunpack.c.l.b16 %v409
    %v474 = vunpack.c.l.b16 %v410
    %v475 = vpack.c.b16 %v444, %v443
    %v476 = vpack.c.b16 %v446, %v445
    %v477 = vpack.c.b16 %v448, %v447
    %v478 = vpack.c.b16 %v450, %v449
    %v479 = vpack.c.b16 %v452, %v451
    %v480 = vpack.c.b16 %v454, %v453
    %v481 = vpack.c.b16 %v456, %v455
    %v482 = vpack.c.b16 %v458, %v457
    %v483 = vpack.c.b16 %v460, %v459
    %v484 = vpack.c.b16 %v462, %v461
    %v485 = vpack.c.b16 %v464, %v463
    %v486 = vpack.c.b16 %v466, %v465
    %v487 = vpack.c.b16 %v468, %v467
    %v488 = vpack.c.b16 %v470, %v469
    %v489 = vpack.c.b16 %v472, %v471
    %v490 = vpack.c.b16 %v474, %v473
    %507 = vmatprep.subr.bf16.mxu0 0
    %508 = vmatpush1.bf16.msra.mxu0 %v482
    %509 = vmatprep.subr.bf16.mxu0 0
    %510 = vmatpush1.bf16.msra.mxu0 %v481
    %511 = vmatprep.subr.bf16.mxu0 0
    %512 = vmatpush1.bf16.msra.mxu0 %v480
    %513 = vmatprep.subr.bf16.mxu0 0
    %514 = vmatpush1.bf16.msra.mxu0 %v479
    %515 = vmatprep.subr.bf16.mxu0 0
    %516 = vmatpush1.bf16.msra.mxu0 %v478
    %517 = vmatprep.subr.bf16.mxu0 0
    %518 = vmatpush1.bf16.msra.mxu0 %v477
    %519 = vmatprep.subr.bf16.mxu0 0
    %520 = vmatpush1.bf16.msra.mxu0 %v476
    %521 = vmatprep.subr.bf16.mxu0 0
    %522 = vmatpush1.bf16.msra.mxu0 %v475
    %523 = vmatprep.subr.bf16.mxu0 0
    %524 = vmatpush2.bf16.msra.mxu0 %v490
    %525 = vmatprep.subr.bf16.mxu0 0
    %526 = vmatpush2.bf16.msra.mxu0 %v489
    %527 = vmatprep.subr.bf16.mxu0 0
    %528 = vmatpush2.bf16.msra.mxu0 %v488
    %529 = vmatprep.subr.bf16.mxu0 0
    %530 = vmatpush2.bf16.msra.mxu0 %v487
    %531 = vmatprep.subr.bf16.mxu0 0
    %532 = vmatpush2.bf16.msra.mxu0 %v486
    %533 = vmatprep.subr.bf16.mxu0 0
    %534 = vmatpush2.bf16.msra.mxu0 %v485
    %535 = vmatprep.subr.bf16.mxu0 0
    %536 = vmatpush2.bf16.msra.mxu0 %v484
    %537 = vmatprep.subr.bf16.mxu0 0
    %538 = vmatpush2.bf16.msra.mxu0 %v483
    %539 = vmatprep.mubr.bf16.mxu0 %v378
    %540 = vmatmul.mubr.bf16.gmra.mxu0 %v377
    %v541 = vpop.f32.mrf.mxu0
    %v542 = vadd.f32 0.0, %v541
    %v543 = vpop.f32.mrf.mxu0
    %v544 = vpop.f32.mrf.mxu0
    %v545 = vpop.f32.mrf.mxu0
    %546 = vdwg.mxu0
    %v547 = vld [vmem:[%s6] sm:$0x1]
    %v549 = vlaneseq
    %v550 = vshrl.u32 %v549, 7
    %v551 = vsub.s32 0, %v550
    %v552 = vrot.slane %v547, %v551
    %v554 = vadd.f32 %v542, %v552
    %vm555 = vcmask 31744
    %556 = vst.msk [vmem:[%s7] sm:$0xff] %vm555, %v554
    // Predicated region
    $region38: #{dynamics_model_forward.1} parent=1 // pred_check
      _
    $region39: #{dynamics_model_forward.1} parent=1 // pred_check_branch
      %558 = sbr.rel (0) target = $region41
    $region40: #{dynamics_model_forward.1} parent=1 // pred_region
      _
    $region41: #{dynamics_model_forward.1} parent=1 // pred_fallthru
      _
    // Predicated region
    $region42: #{dynamics_model_forward.1} parent=1 // pred_check
      _
    $region43: #{dynamics_model_forward.1} parent=1 // pred_check_branch
      %560 = sbr.rel (0) target = $region45
    $region44: #{dynamics_model_forward.1} parent=1 // pred_region
      _
    $region45: #{dynamics_model_forward.1} parent=1 // pred_fallthru
      _
    %561 = vsyncpa [#allocation3], 1
    %562 = vsyncpa [#allocation5], 1

</llo_original>
